<compile_context>
chip_gen: v5e
topology: v5e:2x2
jax: 0.10.0
libtpu: 0.0.40
codegen_flags: <defaults>
</compile_context>

<pallas_src>
import functools

import jax
import jax.numpy as jnp
from jax.experimental import pallas as pl
from jax.experimental.pallas import tpu as pltpu


VMEM_BUDGET_BYTES = 48 * 1024 * 1024  # headroom under v7x's 64 MiB physical VMEM


def _round_up(v, m):
    return ((v + m - 1) // m) * m


def critic_kernel(x_ref, w1_ref, b1_ref, wh_ref, bh_ref, o_ref, *,
                  output_size, inv_output_size):
    # First layer (linear1 applied twice in the reference is idempotent).
    x = x_ref[...].astype(jnp.bfloat16)                               # (TB, I)
    h = jnp.dot(x, w1_ref[...], preferred_element_type=jnp.float32)   # (TB, H), f32 acc
    h = jnp.maximum(h + b1_ref[...], 0.0)                             # bias + ReLU (f32)
    hb = h.astype(jnp.bfloat16)

    # Fused value+advantage heads in one lane-dense (H, PAD) matmul:
    #   cols [0, O)  -> linear3 (advantage)
    #   col  PAD-1   -> linear2 (value)
    #   other cols   -> exactly zero (zero weights and zero bias)
    y = jnp.dot(hb, wh_ref[...], preferred_element_type=jnp.float32) + bh_ref[...]
    y1 = y[:, -1:]                                                    # (TB, 1) value
    adv_sum = jnp.sum(y, axis=1, keepdims=True) - y1                  # padded cols are 0
    corr = y1 - adv_sum * inv_output_size                             # (TB, 1)

    # Store only the O valid columns; the padded matmul result never hits HBM.
    o_ref[...] = (y[:, :output_size] + corr).astype(o_ref.dtype)


def pack_critic_params(w1, b1, w2, b2, w3, b3):
    """One-time packing of the two head layers into a single lane-padded matmul.

    Returns (w1_bf16, b1_f32, w_heads_bf16, b_heads_f32).  PAD stays a multiple
    of 128 so the fused head is whole MXU tiles / lane groups on v5e/v6e/v7x.
    """
    hidden = w1.shape[1]
    output_size = w3.shape[1]
    pad = 128 * pl.cdiv(output_size + 1, 128)
    w_heads = jnp.zeros((hidden, pad), jnp.float32)
    w_heads = w_heads.at[:, :output_size].set(w3)
    w_heads = w_heads.at[:, -1].set(w2[:, 0])
    b_heads = jnp.zeros((1, pad), jnp.float32)
    b_heads = b_heads.at[:, :output_size].set(b3)
    b_heads = b_heads.at[:, -1].set(b2[:, 0])
    return (w1.astype(jnp.bfloat16), b1,
            w_heads.astype(jnp.bfloat16), b_heads)


def _vmem_bytes(tb, input_size, hidden, pad, output_size):
    # Conservative estimate: assume every operand double-buffered by the
    # pipeliner (resident-weight buffers are usually collapsed, but budgeting
    # for 2 keeps us safe on v7x 64 MiB / v5e 16 MiB-scoped defaults).
    weights = 2 * (input_size * hidden * 2 + hidden * 4 + hidden * pad * 2 + pad * 4)
    io = 2 * (tb * input_size * 4 + tb * output_size * 4)
    interm = tb * hidden * 4 + tb * pad * 4                # h and y f32 intermediates
    return weights + io + interm


def critic_forward(x, w1_bf, b1, w_heads, b_heads, *, output_size, tile_b=256):
    """x:(B,I) f32; packed params from pack_critic_params -> (B,O) f32."""
    batch, input_size = x.shape
    hidden = w1_bf.shape[1]
    pad = w_heads.shape[1]

    # Batch tile: aim for >= 4 grid steps (v7x dual-TC sharding + pipelining),
    # cap at tile_b, respect the 8-row sublane granularity, fit the VMEM budget.
    if batch <= 8:
        tb = batch
    else:
        tb = max(8, min(tile_b, _round_up(pl.cdiv(batch, 4), 8)))
        while tb > 8 and _vmem_bytes(tb, input_size, hidden, pad,
                                     output_size) > VMEM_BUDGET_BYTES:
            tb = max(8, _round_up(tb // 2, 8))
    grid = (pl.cdiv(batch, tb),)

    flops = 2 * batch * (input_size * hidden + hidden * pad)
    bytes_accessed = (x.size * 4 + w1_bf.size * 2 + b1.size * 4
                      + w_heads.size * 2 + b_heads.size * 4
                      + batch * output_size * 4)

    kernel = functools.partial(critic_kernel, output_size=output_size,
                               inv_output_size=1.0 / output_size)

    return pl.pallas_call(
        kernel,
        out_shape=jax.ShapeDtypeStruct((batch, output_size), jnp.float32),
        grid=grid,
        in_specs=[
            pl.BlockSpec((tb, input_size), lambda i: (i, 0)),      # x: batch-tiled
            pl.BlockSpec((input_size, hidden), lambda i: (0, 0)),  # weights stay resident
            pl.BlockSpec((1, hidden), lambda i: (0, 0)),
            pl.BlockSpec((hidden, pad), lambda i: (0, 0)),
            pl.BlockSpec((1, pad), lambda i: (0, 0)),
        ],
        # Last block dim equals the full array dim (O), so the (8,128) rule is
        # satisfied; only O columns ever travel to HBM.
        out_specs=pl.BlockSpec((tb, output_size), lambda i: (i, 0)),
        compiler_params=pltpu.CompilerParams(
            dimension_semantics=("parallel",),
            vmem_limit_bytes=VMEM_BUDGET_BYTES),
        cost_estimate=pl.CostEstimate(flops=flops, transcendentals=0,
                                      bytes_accessed=bytes_accessed),
    )(x, w1_bf, b1, w_heads, b_heads)


# Jit the forward so the (shape-static) tiling logic and the pallas_call are
# compiled once per shape; packing stays out of the call path entirely.
critic_forward_jit = jax.jit(critic_forward, static_argnames=("output_size", "tile_b"))


def init_linear_params(key, in_features, out_features):
    """PyTorch-style uniform(-1/sqrt(fan_in), 1/sqrt(fan_in)); weight stored (in, out)."""
    kw, kb = jax.random.split(key)
    bound = 1.0 / jnp.sqrt(jnp.float32(in_features))
    w = jax.random.uniform(kw, (in_features, out_features), jnp.float32, -bound, bound)
    b = jax.random.uniform(kb, (1, out_features), jnp.float32, -bound, bound)
    return w, b


def critic_reference_f32(x, w1, b1, w2, b2, w3, b3):
    """Plain-JAX full-f32 reference mirroring the PyTorch forward exactly."""
    h = jax.nn.relu(x @ w1 + b1)
    y1 = h @ w2 + b2
    y2 = h @ w3 + b3
    return y1 + y2 - jnp.mean(y2, axis=1, keepdims=True)


def critic_reference_bf16(x, w1, b1, w2, b2, w3, b3):
    """Same-precision reference: bf16 matmul operands, f32 accumulation (as the kernel)."""
    bf = jnp.bfloat16
    xb = x.astype(bf)
    h = jax.nn.relu(
        jnp.dot(xb, w1.astype(bf), preferred_element_type=jnp.float32) + b1)
    hb = h.astype(bf)
    y1 = jnp.dot(hb, w2.astype(bf), preferred_element_type=jnp.float32) + b2
    y2 = jnp.dot(hb, w3.astype(bf), preferred_element_type=jnp.float32) + b3
    return y1 + y2 - jnp.mean(y2, axis=1, keepdims=True)


if __name__ == "__main__":
    input_size, hidden_size, output_size = 16, 32, 4
    batch = 8

    root = jax.random.PRNGKey(0)
    k_x, k1, k2, k3 = jax.random.split(root, 4)

    x = jax.random.normal(k_x, (batch, input_size), jnp.float32)
    w1, b1 = init_linear_params(k1, input_size, hidden_size)
    w2, b2 = init_linear_params(k2, hidden_size, 1)
    w3, b3 = init_linear_params(k3, hidden_size, output_size)

    # Head packing / bf16 casts done once at parameter-init time.
    w1_bf, b1_p, w_heads, b_heads = pack_critic_params(w1, b1, w2, b2, w3, b3)

    out = critic_forward_jit(x, w1_bf, b1_p, w_heads, b_heads,
                             output_size=output_size)
    out = jax.block_until_ready(out)
    assert out.shape == (batch, output_size)

    # Tight check vs a same-precision (bf16 operands / f32 accumulate) reference.
    ref_bf16 = critic_reference_bf16(x, w1, b1, w2, b2, w3, b3)
    assert jnp.allclose(out, ref_bf16, atol=1e-4, rtol=1e-4), "mismatch vs bf16 reference"

    # Sanity check vs the full-f32 PyTorch-equivalent reference (loose: bf16 MXU inputs).
    ref_f32 = critic_reference_f32(x, w1, b1, w2, b2, w3, b3)
    assert jnp.allclose(out, ref_f32, atol=1e-1, rtol=1e-1), "mismatch vs f32 reference"

    print("KERNEL_OK")
</pallas_src>

<mosaic_0001>
module attributes {stable_mosaic.version = 11 : i64} {
  func.func @critic_kernel(%arg0: i32, %arg1: memref<8x16xf32, #tpu.memory_space<vmem>>, %arg2: memref<16x32xbf16, #tpu.memory_space<vmem>>, %arg3: memref<1x32xf32, #tpu.memory_space<vmem>>, %arg4: memref<32x128xbf16, #tpu.memory_space<vmem>>, %arg5: memref<1x128xf32, #tpu.memory_space<vmem>>, %arg6: memref<8x4xf32, #tpu.memory_space<vmem>>) attributes {dimension_semantics = [#tpu.dimension_semantics<parallel>], iteration_bounds = array<i64: 1>, scalar_prefetch = 0 : i64, scratch_operands = 0 : i64, tpu.core_type = #tpu.core_type<tc>, window_params = [{transform_indices = @transform_0, window_bounds = array<i64: 8, 16>}, {pipeline_mode = #tpu.pipeline_mode<synchronous>, transform_indices = @transform_1, window_bounds = array<i64: 16, 32>}, {pipeline_mode = #tpu.pipeline_mode<synchronous>, transform_indices = @transform_2, window_bounds = array<i64: 1, 32>}, {pipeline_mode = #tpu.pipeline_mode<synchronous>, transform_indices = @transform_3, window_bounds = array<i64: 32, 128>}, {pipeline_mode = #tpu.pipeline_mode<synchronous>, transform_indices = @transform_4, window_bounds = array<i64: 1, 128>}, {transform_indices = @transform_5, window_bounds = array<i64: 8, 4>}]} {
    %c0 = arith.constant 0 : index
    %c0_0 = arith.constant 0 : index
    %0 = vector.load %arg1[%c0, %c0_0] : memref<8x16xf32, #tpu.memory_space<vmem>>, vector<8x16xf32>
    %1 = arith.truncf %0 : vector<8x16xf32> to vector<8x16xbf16>
    %c0_1 = arith.constant 0 : index
    %c0_2 = arith.constant 0 : index
    %2 = vector.load %arg2[%c0_1, %c0_2] : memref<16x32xbf16, #tpu.memory_space<vmem>>, vector<16x32xbf16>
    %cst = arith.constant dense<0.000000e+00> : vector<8x32xf32>
    %3 = tpu.matmul %1, %2, %cst {dimension_numbers = #tpu.dot_dimension_numbers<[1], [0], [0], [1], [0, 0, 1, 1], [], []>} : vector<8x16xbf16>, vector<16x32xbf16>, vector<8x32xf32> -> vector<8x32xf32>
    %c0_3 = arith.constant 0 : index
    %c0_4 = arith.constant 0 : index
    %4 = vector.load %arg3[%c0_3, %c0_4] : memref<1x32xf32, #tpu.memory_space<vmem>>, vector<1x32xf32>
    %5 = vector.broadcast %4 : vector<1x32xf32> to vector<8x32xf32>
    %6 = arith.addf %3, %5 : vector<8x32xf32>
    %cst_5 = arith.constant 0.000000e+00 : f32
    %7 = vector.broadcast %cst_5 : f32 to vector<8x32xf32>
    %8 = arith.maximumf %6, %7 : vector<8x32xf32>
    %9 = arith.truncf %8 : vector<8x32xf32> to vector<8x32xbf16>
    %c0_6 = arith.constant 0 : index
    %c0_7 = arith.constant 0 : index
    %10 = vector.load %arg4[%c0_6, %c0_7] : memref<32x128xbf16, #tpu.memory_space<vmem>>, vector<32x128xbf16>
    %cst_8 = arith.constant dense<0.000000e+00> : vector<8x128xf32>
    %11 = tpu.matmul %9, %10, %cst_8 {dimension_numbers = #tpu.dot_dimension_numbers<[1], [0], [0], [1], [0, 0, 1, 1], [], []>} : vector<8x32xbf16>, vector<32x128xbf16>, vector<8x128xf32> -> vector<8x128xf32>
    %c0_9 = arith.constant 0 : index
    %c0_10 = arith.constant 0 : index
    %12 = vector.load %arg5[%c0_9, %c0_10] : memref<1x128xf32, #tpu.memory_space<vmem>>, vector<1x128xf32>
    %13 = vector.broadcast %12 : vector<1x128xf32> to vector<8x128xf32>
    %14 = arith.addf %11, %13 : vector<8x128xf32>
    %15 = vector.extract_strided_slice %14 {offsets = [0, 127], sizes = [8, 1], strides = [1, 1]} : vector<8x128xf32> to vector<8x1xf32>
    %cst_11 = arith.constant dense<0.000000e+00> : vector<8xf32>
    %16 = vector.multi_reduction <add>, %14, %cst_11 [1] : vector<8x128xf32> to vector<8xf32>
    %17 = vector.shape_cast %16 : vector<8xf32> to vector<8x1xf32>
    %18 = arith.subf %17, %15 : vector<8x1xf32>
    %cst_12 = arith.constant 2.500000e-01 : f32
    %19 = vector.broadcast %cst_12 : f32 to vector<8x1xf32>
    %20 = arith.mulf %18, %19 : vector<8x1xf32>
    %21 = arith.subf %15, %20 : vector<8x1xf32>
    %22 = vector.extract_strided_slice %14 {offsets = [0, 0], sizes = [8, 4], strides = [1, 1]} : vector<8x128xf32> to vector<8x4xf32>
    %23 = vector.broadcast %21 : vector<8x1xf32> to vector<8x4xf32>
    %24 = arith.addf %22, %23 : vector<8x4xf32>
    %c0_13 = arith.constant 0 : index
    %c0_14 = arith.constant 0 : index
    %25 = vector.load %arg6[%c0_13, %c0_14] : memref<8x4xf32, #tpu.memory_space<vmem>>, vector<8x4xf32>
    tpu.vector_store %arg6[%c0_13, %c0_14], %24 {strides = array<i32>} : memref<8x4xf32, #tpu.memory_space<vmem>>, vector<8x4xf32>,
    return
  }
  func.func @transform_0(%arg0: i32) -> (i32, i32) {
    %c0_i32 = arith.constant 0 : i32
    %c0_i32_0 = arith.constant 0 : i32
    return %arg0, %c0_i32 : i32, i32
  }
  func.func @transform_1(%arg0: i32) -> (i32, i32) {
    %c0_i32 = arith.constant 0 : i32
    %c0_i32_0 = arith.constant 0 : i32
    %c0_i32_1 = arith.constant 0 : i32
    return %c0_i32, %c0_i32_0 : i32, i32
  }
  func.func @transform_2(%arg0: i32) -> (i32, i32) {
    %c0_i32 = arith.constant 0 : i32
    %c0_i32_0 = arith.constant 0 : i32
    %c0_i32_1 = arith.constant 0 : i32
    return %c0_i32, %c0_i32_0 : i32, i32
  }
  func.func @transform_3(%arg0: i32) -> (i32, i32) {
    %c0_i32 = arith.constant 0 : i32
    %c0_i32_0 = arith.constant 0 : i32
    %c0_i32_1 = arith.constant 0 : i32
    return %c0_i32, %c0_i32_0 : i32, i32
  }
  func.func @transform_4(%arg0: i32) -> (i32, i32) {
    %c0_i32 = arith.constant 0 : i32
    %c0_i32_0 = arith.constant 0 : i32
    %c0_i32_1 = arith.constant 0 : i32
    return %c0_i32, %c0_i32_0 : i32, i32
  }
  func.func @transform_5(%arg0: i32) -> (i32, i32) {
    %c0_i32 = arith.constant 0 : i32
    %c0_i32_0 = arith.constant 0 : i32
    return %arg0, %c0_i32 : i32, i32
  }
}

</mosaic_0001>

<llo_original>
// kernel: critic_forward.1
$region0: #{critic_forward.1}
  #allocation0 [shape = 'u32[]', space=smem, size = 0x4, offset = 0x4, fixed_abs, tag = 'smem constant byte address 0x4 - core index']
  #allocation1 [shape = 'u32[72,128]{1,0:T(1,128)}', space=vmem, size = 0x9000, scoped, tag = 'internal scratch']
  %s0 = inlined_call_operand.hbm [shape: f32[8,16], index: 0, kind: input, shape index: {}]
  %s1 = inlined_call_operand.hbm [shape: bf16[16,32], index: 1, kind: input, shape index: {}]
  %s2 = inlined_call_operand.vmem [shape: f32[1,32], index: 2, kind: input, shape index: {}]
  %s3 = inlined_call_operand.hbm [shape: bf16[32,128], index: 3, kind: input, shape index: {}]
  %s4 = inlined_call_operand.vmem [shape: f32[1,128], index: 4, kind: input, shape index: {}]
  %s5 = inlined_call_operand.vmem [shape: f32[8,4], index: 5, kind: output, shape index: {}]
  %s6 = sld [smem:[#allocation0]]
  $region42: #{critic_forward.1} parent=0
    _
  %s8 = ssub.s32 1, %s6
  %s9 = scalar_select 0, %s8, %s6
  $region1: #{critic_forward.1} parent=0
    #allocation2 [shape = 'u8[4096]{0}', space=vmem, size = 0x1000, scoped, tag = 'input window, operand 0, single buffered']
    #allocation3 [shape = 's32[1]{0}', space=sflag, size = 0x4, scoped, tag = 'scoped memory for critic_forward.1']
    #allocation4 [shape = 'u8[4096]{0}', space=vmem, size = 0x1000, scoped, tag = 'input window, operand 1, single buffered']
    #allocation5 [shape = 's32[1]{0}', space=sflag, size = 0x4, scoped, tag = 'scoped memory for critic_forward.1']
    #allocation6 [shape = 'u8[8192]{0}', space=vmem, size = 0x2000, scoped, tag = 'input window, operand 3, single buffered']
    %10 = vsyncpa [#allocation3], 0
    %11 = vsyncpa [#allocation5], 0
    // Predicated region
    $region2: #{critic_forward.1} parent=1 // pred_check
      _
    $region3: #{critic_forward.1} parent=1 // pred_check_branch
      %13 = sbr.rel (0) target = $region5
    $region4: #{critic_forward.1} parent=1 // pred_region
      %15 = vsyncadd [#allocation3], 0
      %s17 = sshll.u32 %s0, 4
      %s18 = int_to_ptr.hbm [resolvable:$true] %s17
      %s19 = sshll.u32 [#allocation2], 4
      %s20 = int_to_ptr.vmem [resolvable:$true] %s19
      %22 = dma.hbm_to_vmem [thread:$0]  %s18, 128, %s20, [#allocation3]
    $region5: #{critic_forward.1} parent=1 // pred_fallthru
      _
    // Predicated region
    $region6: #{critic_forward.1} parent=1 // pred_check
      _
    $region7: #{critic_forward.1} parent=1 // pred_check_branch
      %24 = sbr.rel (0) target = $region9
    $region8: #{critic_forward.1} parent=1 // pred_region
      %26 = vsyncadd [#allocation5], 0
      %s27 = sshll.u32 %s1, 4
      %s28 = int_to_ptr.hbm [resolvable:$true] %s27
      %s29 = sshll.u32 [#allocation4], 4
      %s30 = int_to_ptr.vmem [resolvable:$true] %s29
      %35 = dma.hbm_to_vmem [thread:$0]  %s28, 128, %s30, [#allocation5], 64, 64, 4
    $region9: #{critic_forward.1} parent=1 // pred_fallthru
      _
    // Predicated region
    $region10: #{critic_forward.1} parent=1 // pred_check
      _
    $region11: #{critic_forward.1} parent=1 // pred_check_branch
      %37 = sbr.rel (0) target = $region13
    $region12: #{critic_forward.1} parent=1 // pred_region
      _
    $region13: #{critic_forward.1} parent=1 // pred_fallthru
      _
    // Predicated region
    $region14: #{critic_forward.1} parent=1 // pred_check
      _
    $region15: #{critic_forward.1} parent=1 // pred_check_branch
      %39 = sbr.rel (0) target = $region17
    $region16: #{critic_forward.1} parent=1 // pred_region
      %41 = vsyncadd [#allocation5], 0
      %s42 = sshll.u32 %s3, 4
      %s43 = int_to_ptr.hbm [resolvable:$true] %s42
      %s44 = sshll.u32 [#allocation6], 4
      %s45 = int_to_ptr.vmem [resolvable:$true] %s44
      %50 = dma.hbm_to_vmem [thread:$0]  %s43, 256, %s45, [#allocation5], 64, 64, 4
    $region17: #{critic_forward.1} parent=1 // pred_fallthru
      _
    // Predicated region
    $region18: #{critic_forward.1} parent=1 // pred_check
      _
    $region19: #{critic_forward.1} parent=1 // pred_check_branch
      %52 = sbr.rel (0) target = $region21
    $region20: #{critic_forward.1} parent=1 // pred_region
      _
    $region21: #{critic_forward.1} parent=1 // pred_fallthru
      _
    // Predicated region
    $region22: #{critic_forward.1} parent=1 // pred_check
      _
    $region23: #{critic_forward.1} parent=1 // pred_check_branch
      %54 = sbr.rel (0) target = $region25
    $region24: #{critic_forward.1} parent=1 // pred_region
      %56 = dma.done [#allocation3], 128
    $region25: #{critic_forward.1} parent=1 // pred_fallthru
      _
    // Predicated region
    $region26: #{critic_forward.1} parent=1 // pred_check
      _
    $region27: #{critic_forward.1} parent=1 // pred_check_branch
      %58 = sbr.rel (0) target = $region29
    $region28: #{critic_forward.1} parent=1 // pred_region
      %60 = dma.done [#allocation5], 128
    $region29: #{critic_forward.1} parent=1 // pred_fallthru
      _
    // Predicated region
    $region30: #{critic_forward.1} parent=1 // pred_check
      _
    $region31: #{critic_forward.1} parent=1 // pred_check_branch
      %62 = sbr.rel (0) target = $region33
    $region32: #{critic_forward.1} parent=1 // pred_region
      %64 = dma.done [#allocation5], 256
    $region33: #{critic_forward.1} parent=1 // pred_fallthru
      _
    %v66 = vld [vmem:[#allocation2] sm:$0xff]
    %v67 = vpack.c.bf16 %v66, %v66
    %v68 = vld [vmem:[#allocation4] sm:$0xf]
    %v69 = vld [vmem:[#allocation4 + $0x4] sm:$0xf]
    %v70 = vld [vmem:[%s2] sm:$0x1]
    %v72 = vperm.slane %v70, 0
    %v76 = vunpack.c.l.b16 %v68
    %v77 = vunpack.c.l.b16 %v69
    %v78 = vpack.c.b16 %v77, %v76
    %vm80 = vcmask 130048
    %v82 = vsel %vm80, %v67, 0
    %84 = vmatpush.bf16.msra.mxu0 0
    %85 = vmatpush.bf16.msra.mxu0 0
    %86 = vmatpush.bf16.msra.mxu0 0
    %87 = vmatpush.bf16.msra.mxu0 0
    %88 = vmatpush.bf16.msra.mxu0 0
    %89 = vmatpush.bf16.msra.mxu0 0
    %90 = vmatpush.bf16.msra.mxu0 0
    %91 = vmatpush.bf16.msra.mxu0 %v78
    %92 = vmatmul.bf16.gmra.mxu0 %v82
    %v93 = vpop.f32.mrf.mxu0
    %v94 = vadd.f32 %v72, %v93
    %v95 = vpop.f32.mrf.mxu0
    %96 = vdwg.mxu0
    %v97 = vmax.f32 %v94, 0.0
    %v98 = vpack.c.bf16 %v97, %v97
    %v99 = vld [vmem:[#allocation6] sm:$0xf]
    %v100 = vld [vmem:[#allocation6 + $0x4] sm:$0xf]
    %v101 = vld [vmem:[#allocation6 + $0x8] sm:$0xf]
    %v102 = vld [vmem:[#allocation6 + $0xc] sm:$0xf]
    %v103 = vld [vmem:[%s4] sm:$0x1]
    %v105 = vperm.slane %v103, 0
    %v111 = vunpack.c.l.b16 %v99
    %v112 = vunpack.c.l.b16 %v100
    %v113 = vunpack.c.l.b16 %v101
    %v114 = vunpack.c.l.b16 %v102
    %v115 = vpack.c.b16 %v112, %v111
    %v116 = vpack.c.b16 %v114, %v113
    %vm119 = vcmask 261120
    %v121 = vsel %vm119, %v98, 0
    %123 = vmatpush.bf16.msra.mxu0 0
    %124 = vmatpush.bf16.msra.mxu0 0
    %125 = vmatpush.bf16.msra.mxu0 0
    %126 = vmatpush.bf16.msra.mxu0 0
    %127 = vmatpush.bf16.msra.mxu0 0
    %128 = vmatpush.bf16.msra.mxu0 0
    %129 = vmatpush.bf16.msra.mxu0 %v116
    %130 = vmatpush.bf16.msra.mxu0 %v115
    %131 = vmatmul.bf16.gmra.mxu0 %v121
    %v132 = vpop.f32.mrf.mxu0
    %v133 = vadd.f32 %v105, %v132
    %v134 = vpop.f32.mrf.mxu0
    %135 = vdwg.mxu0
    %136 = vadd.xlane.f32.xlu0 %v133
    %v137 = vpop.xlane.xlu0 %136
    %v138 = vsub.f32 %v137, %v133
    %v139 = vmul.f32 %v138, 0.25
    %v140 = vsub.f32 %v133, %v139
    %142 = vset.pattern.permute.xlu0 127
    %143 = vperm.xlu0 %142, %v140
    %v144 = vpop.permute.xlu0 %143
    %v146 = vadd.f32 %v133, %v144
    %vm147 = vcmask 31744
    %148 = vst.msk [vmem:[%s5] sm:$0xff] %vm147, %v146
    // Predicated region
    $region34: #{critic_forward.1} parent=1 // pred_check
      _
    $region35: #{critic_forward.1} parent=1 // pred_check_branch
      %150 = sbr.rel (0) target = $region37
    $region36: #{critic_forward.1} parent=1 // pred_region
      _
    $region37: #{critic_forward.1} parent=1 // pred_fallthru
      _
    // Predicated region
    $region38: #{critic_forward.1} parent=1 // pred_check
      _
    $region39: #{critic_forward.1} parent=1 // pred_check_branch
      %152 = sbr.rel (0) target = $region41
    $region40: #{critic_forward.1} parent=1 // pred_region
      _
    $region41: #{critic_forward.1} parent=1 // pred_fallthru
      _
    %153 = vsyncpa [#allocation3], 1
    %154 = vsyncpa [#allocation5], 1

</llo_original>
